<compile_context>
chip_gen: v6e
topology: v6e:2x2x1
jax: 0.10.0
libtpu: 0.0.40
codegen_flags: <defaults>
</compile_context>

<pallas_src>
import functools

import jax
import jax.numpy as jnp
import numpy as np
from jax.experimental import pallas as pl
from jax.experimental.pallas import tpu as pltpu
from jax.scipy.linalg import block_diag


# ---------------------------------------------------------------------------
# Tiling helpers
# ---------------------------------------------------------------------------
def _pick_tile(dim, target, aligns):
    """Largest tile <= target that divides `dim` and is aligned to one of
    `aligns` (tried in order); falls back to the full dim (always legal)."""
    if dim <= target:
        return dim
    for a in aligns:
        t = (target // a) * a
        while t >= a:
            if dim % t == 0:
                return t
            t -= a
    return dim


def _pick_batch_tile(batch, n_tok, channels, max_bt=8, vmem_budget=8 * 1024 * 1024):
    """Batch elements per SAFA grid step: amortize the ~0.35us per-step overhead
    and fill MXU sublanes, but keep >= 2 grid steps (v7x megacore) and keep the
    tok block under a VMEM budget (sized for v7x's smaller VMEM)."""
    cap = max(1, vmem_budget // max(1, n_tok * channels * 4))
    cap = min(cap, max_bt, max(1, batch // 2))
    best = 1
    for bt in range(1, cap + 1):
        if batch % bt == 0:
            best = bt
    return best


# ---------------------------------------------------------------------------
# Kernel 1: synthetic backbone = 16x16 patch embedding, tiled MXU matmul.
# TODO(synk): the real `backbone` is an injected nn.Module whose architecture
# is not defined in this file; a ViT-style linear patch embedding is used so
# the (B, N, C) token contract of the forward pass is preserved.
# ---------------------------------------------------------------------------
def _embed_kernel(p_ref, w_ref, b_ref, o_ref, acc_ref):
    """One (tm, tn) output tile; accumulate over the k grid axis in f32 VMEM."""

    @pl.when(pl.program_id(2) == 0)
    def _init():
        acc_ref[...] = jnp.zeros_like(acc_ref)

    acc_ref[...] += jnp.dot(p_ref[...], w_ref[...],
                            preferred_element_type=jnp.float32)

    @pl.when(pl.program_id(2) == pl.num_programs(2) - 1)
    def _finalize():
        o_ref[...] = (acc_ref[...] + b_ref[...]).astype(o_ref.dtype)


def patch_embed(patches, w_emb, b_emb):
    """tok = patches @ w_emb + b_emb. bf16 MXU inputs, f32 accumulation."""
    M, K = patches.shape
    N = w_emb.shape[1]
    # Tile targets sized against v7x (64 MiB physical / 32 MiB scoped VMEM):
    # bf16 inputs double-buffered + f32 accumulator stay under ~6 MiB.
    tm = _pick_tile(M, 512, (256, 8))
    tn = _pick_tile(N, 256, (256, 128))
    tk = _pick_tile(K, 1024, (256, 128))
    grid = (M // tm, N // tn, K // tk)
    return pl.pallas_call(
        _embed_kernel,
        out_shape=jax.ShapeDtypeStruct((M, N), jnp.float32),
        grid=grid,
        in_specs=[
            pl.BlockSpec((tm, tk), lambda i, j, k: (i, k)),
            pl.BlockSpec((tk, tn), lambda i, j, k: (k, j)),
            pl.BlockSpec((1, tn), lambda i, j, k: (0, j)),
        ],
        out_specs=pl.BlockSpec((tm, tn), lambda i, j, k: (i, j)),
        scratch_shapes=[pltpu.VMEM((tm, tn), jnp.float32)],
        compiler_params=pltpu.CompilerParams(
            dimension_semantics=("parallel", "parallel", "arbitrary"),
            vmem_limit_bytes=32 * 1024 * 1024),
    )(patches.astype(jnp.bfloat16), w_emb.astype(jnp.bfloat16),
      b_emb.reshape(1, N).astype(jnp.float32))


# ---------------------------------------------------------------------------
# Kernel 2: SAFA hot path, Bt batch elements per grid step.
#   AvgPool2d(2,2) as one (Np, n_tok) @ (n_tok, C) matmul per element (single
#   read of tok, no host transpose), channel mean as a lane reduce, the 8
#   head-MLPs fused into two wide matmuls, and the final (D, Np) @ (Np, C)
#   projection written as a lane-dense (1, D*C) row per element.
# ---------------------------------------------------------------------------
def _safa_kernel(tok_ref, pt_ref, w1_ref, b1_ref, w2_ref, b2_ref, out_ref, *,
                 bt, nheads):
    n_pool = pt_ref.shape[0]
    c = tok_ref.shape[-1]
    PT = pt_ref[...]                                               # (Np, n_tok)

    # AvgPool2d(2,2): fx[b]^T = PT @ tok[b]  -> (Np, C) per element.
    pooled = [jnp.dot(PT, tok_ref[b], preferred_element_type=jnp.float32)
              for b in range(bt)]

    # SpatialAware channel mean (torch: mean over dim=1 of (B, C, Np)) is a
    # lane-axis reduce here; gather rows so the whole batch tile feeds one
    # fused layer-1 matmul.
    m = jnp.concatenate(
        [jnp.mean(p, axis=-1, keepdims=True).T for p in pooled], axis=0)  # (bt, Np)

    # 8 head-MLPs fused: layer 1 is one (bt, Np) @ (Np, D*hd) matmul, layer 2
    # one (bt, D*hd) @ (D*hd, D*Np) block-diagonal matmul (2 MXU pushes instead
    # of 16 one-row matmuls + concat relayouts).
    h = jnp.dot(m, w1_ref[...], preferred_element_type=jnp.float32) + b1_ref[...]
    sa = jnp.dot(h, w2_ref[...], preferred_element_type=jnp.float32) + b2_ref[...]  # (bt, D*Np)

    # Final projection: (fx @ x_sa)^T == x_sa^T @ fx^T = sa_b @ pooled_b.
    for b in range(bt):
        y_b = jnp.dot(sa[b].reshape(nheads, n_pool), pooled[b],
                      preferred_element_type=jnp.float32)           # (D, C)
        # Row-major (D, C) flatten reproduces torch transpose(-1,-2).flatten(-2,-1);
        # stored as one lane-dense (1, D*C) row (full-width vst).
        out_ref[b] = y_b.reshape(1, nheads * c)


def safa_spatial(tok, pool_mat_t, w1s, b1s, w2s, b2s):
    B, n_tok, C = tok.shape
    Np = pool_mat_t.shape[0]
    D, _, hd = w1s.shape
    bt = _pick_batch_tile(B, n_tok, C)

    # Fuse the per-head MLP weights once (constant-folded under jit).
    w1f = jnp.transpose(w1s, (1, 0, 2)).reshape(Np, D * hd)        # (Np, D*hd)
    b1f = b1s.reshape(1, D * hd)
    w2bd = block_diag(*[w2s[d] for d in range(D)])                 # (D*hd, D*Np)
    b2f = b2s.reshape(1, D * Np)

    kernel = functools.partial(_safa_kernel, bt=bt, nheads=D)
    out = pl.pallas_call(
        kernel,
        out_shape=jax.ShapeDtypeStruct((B, 1, D * C), jnp.float32),
        grid=(B // bt,),
        in_specs=[
            pl.BlockSpec((bt, n_tok, C), lambda i: (i, 0, 0)),
            pl.BlockSpec((Np, n_tok), lambda i: (0, 0)),
            pl.BlockSpec((Np, D * hd), lambda i: (0, 0)),
            pl.BlockSpec((1, D * hd), lambda i: (0, 0)),
            pl.BlockSpec((D * hd, D * Np), lambda i: (0, 0)),
            pl.BlockSpec((1, D * Np), lambda i: (0, 0)),
        ],
        out_specs=pl.BlockSpec((bt, 1, D * C), lambda i: (i, 0, 0)),
        compiler_params=pltpu.CompilerParams(
            dimension_semantics=("parallel",),
            vmem_limit_bytes=32 * 1024 * 1024),
    )(tok, pool_mat_t, w1f, b1f, w2bd, b2f)
    return out.reshape(B, D * C)


# ---------------------------------------------------------------------------
# Full forward (glue in plain JAX + the two Pallas kernels above).
# ---------------------------------------------------------------------------
def build_pool_matrix_t(H, W):
    """PT (Np, n_tok): PT @ tok[b] reproduces AvgPool2d(2,2) on the patch grid."""
    Hp, Wp = H // 2, W // 2
    PT = np.zeros((Hp * Wp, H * W), np.float32)
    for h in range(H):
        for w in range(W):
            PT[(h // 2) * Wp + (w // 2), h * W + w] = 0.25
    return jnp.asarray(PT)


def safa_branch_forward(x, params):
    B, Cin, Himg, Wimg = x.shape
    H, W = Himg // 16, Wimg // 16
    n_tok = H * W
    C = params["w_emb"].shape[1]

    # TODO(synk): the patchify 6-D transpose below is still a standalone XLA op;
    # it could be fused into the embed pallas_call (allow_input_fusion or an
    # image-space index_map) to save one HBM round trip of the input image.
    patches = (
        x.reshape(B, Cin, H, 16, W, 16)
        .transpose(0, 2, 4, 1, 3, 5)
        .reshape(B * n_tok, Cin * 16 * 16)
    )
    tok = patch_embed(patches, params["w_emb"], params["b_emb"]).reshape(B, n_tok, C)

    pool_mat_t = build_pool_matrix_t(H, W)
    return safa_spatial(tok, pool_mat_t, params["w1s"], params["b1s"],
                        params["w2s"], params["b2s"])


def reference_forward(x, params):
    """Pure-JAX reference. The embed inputs are rounded to bf16 exactly like the
    kernel (the kernel uses bf16 MXU inputs with f32 accumulation), so both
    paths compute the same function; everything downstream is f32."""
    B, Cin, Himg, Wimg = x.shape
    H, W = Himg // 16, Wimg // 16
    n_tok = H * W
    C = params["w_emb"].shape[1]
    D = params["w1s"].shape[0]

    patches = (
        x.reshape(B, Cin, H, 16, W, 16)
        .transpose(0, 2, 4, 1, 3, 5)
        .reshape(B * n_tok, Cin * 16 * 16)
    )
    pe = patches.astype(jnp.bfloat16).astype(jnp.float32)
    we = params["w_emb"].astype(jnp.bfloat16).astype(jnp.float32)
    tok = (pe @ we + params["b_emb"]).reshape(B, n_tok, C)

    feat = jnp.transpose(tok, (0, 2, 1)).reshape(B, C, H, W)
    pooled = feat.reshape(B, C, H // 2, 2, W // 2, 2).mean(axis=(3, 5))
    fx = pooled.reshape(B, C, (H // 2) * (W // 2))           # (B, C, Np)

    m = fx.mean(axis=1)                                      # (B, Np)
    branches = []
    for d in range(D):
        h = m @ params["w1s"][d] + params["b1s"][d][0]
        branches.append(h @ params["w2s"][d] + params["b2s"][d][0])
    x_sa = jnp.stack(branches, axis=-1)                      # (B, Np, D)

    y = fx @ x_sa                                            # (B, C, D)
    return jnp.transpose(y, (0, 2, 1)).reshape(B, D * C)


if __name__ == "__main__":
    # Small shapes: B=2, Cin=3, image 64x64 -> H=W=4 tokens, pooled Np=4, C=32, d=8 heads.
    B, Cin, Himg, Wimg = 2, 3, 64, 64
    C, D = 32, 8
    H, W = Himg // 16, Wimg // 16
    Np = (H // 2) * (W // 2)
    hd = Np // 2
    Pdim = Cin * 16 * 16

    key = jax.random.PRNGKey(0)
    kx, k0, k1, k2, k3, k4, k5 = jax.random.split(key, 7)
    x = jax.random.normal(kx, (B, Cin, Himg, Wimg), jnp.float32)

    params = {
        "w_emb": jax.random.normal(k0, (Pdim, C), jnp.float32) * 0.02,
        "b_emb": jax.random.normal(k1, (C,), jnp.float32) * 0.02,
        "w1s": jax.random.normal(k2, (D, Np, hd), jnp.float32) * 0.5,
        "b1s": jax.random.normal(k3, (D, 1, hd), jnp.float32) * 0.1,
        "w2s": jax.random.normal(k4, (D, hd, Np), jnp.float32) * 0.5,
        "b2s": jax.random.normal(k5, (D, 1, Np), jnp.float32) * 0.1,
    }

    out = safa_branch_forward(x, params)
    out = jax.block_until_ready(out)

    ref = reference_forward(x, params)
    assert out.shape == (B, D * C), out.shape
    np.testing.assert_allclose(np.asarray(out), np.asarray(ref), rtol=1e-3, atol=1e-3)

    print("KERNEL_OK")
</pallas_src>

<mosaic_0001>
module attributes {stable_mosaic.version = 11 : i64} {
  func.func @_embed_kernel(%arg0: i32, %arg1: i32, %arg2: i32, %arg3: memref<32x768xbf16, #tpu.memory_space<vmem>>, %arg4: memref<768x32xbf16, #tpu.memory_space<vmem>>, %arg5: memref<1x32xf32, #tpu.memory_space<vmem>>, %arg6: memref<32x32xf32, #tpu.memory_space<vmem>>, %arg7: memref<32x32xf32, #tpu.memory_space<vmem>>) attributes {dimension_semantics = [#tpu.dimension_semantics<parallel>, #tpu.dimension_semantics<parallel>, #tpu.dimension_semantics<arbitrary>], iteration_bounds = array<i64: 1, 1, 1>, scalar_prefetch = 0 : i64, scratch_operands = 1 : i64, tpu.core_type = #tpu.core_type<tc>, window_params = [{transform_indices = @transform_0, window_bounds = array<i64: 32, 768>}, {transform_indices = @transform_1, window_bounds = array<i64: 768, 32>}, {transform_indices = @transform_2, window_bounds = array<i64: 1, 32>}, {transform_indices = @transform_3, window_bounds = array<i64: 32, 32>}]} {
    %c0_i32 = arith.constant 0 : i32
    %0 = arith.cmpi eq, %arg2, %c0_i32 : i32
    %1 = arith.extui %0 : i1 to i32
    %c0_i32_0 = arith.constant 0 : i32
    %2 = arith.cmpi ne, %1, %c0_i32_0 : i32
    scf.if %2 {
      %cst_10 = arith.constant 0.000000e+00 : f32
      %12 = vector.broadcast %cst_10 : f32 to vector<32x32xf32>
      %c0_11 = arith.constant 0 : index
      %c0_12 = arith.constant 0 : index
      %13 = vector.load %arg7[%c0_11, %c0_12] : memref<32x32xf32, #tpu.memory_space<vmem>>, vector<32x32xf32>
      tpu.vector_store %arg7[%c0_11, %c0_12], %12 {strides = array<i32>} : memref<32x32xf32, #tpu.memory_space<vmem>>, vector<32x32xf32>,
    } else {
    }
    %c0 = arith.constant 0 : index
    %c0_1 = arith.constant 0 : index
    %3 = vector.load %arg7[%c0, %c0_1] : memref<32x32xf32, #tpu.memory_space<vmem>>, vector<32x32xf32>
    %c0_2 = arith.constant 0 : index
    %c0_3 = arith.constant 0 : index
    %4 = vector.load %arg3[%c0_2, %c0_3] : memref<32x768xbf16, #tpu.memory_space<vmem>>, vector<32x768xbf16>
    %c0_4 = arith.constant 0 : index
    %c0_5 = arith.constant 0 : index
    %5 = vector.load %arg4[%c0_4, %c0_5] : memref<768x32xbf16, #tpu.memory_space<vmem>>, vector<768x32xbf16>
    %cst = arith.constant dense<0.000000e+00> : vector<32x32xf32>
    %6 = tpu.matmul %4, %5, %cst {dimension_numbers = #tpu.dot_dimension_numbers<[1], [0], [0], [1], [0, 0, 1, 1], [], []>} : vector<32x768xbf16>, vector<768x32xbf16>, vector<32x32xf32> -> vector<32x32xf32>
    %7 = arith.addf %3, %6 : vector<32x32xf32>
    %c0_6 = arith.constant 0 : index
    %c0_7 = arith.constant 0 : index
    %8 = vector.load %arg7[%c0_6, %c0_7] : memref<32x32xf32, #tpu.memory_space<vmem>>, vector<32x32xf32>
    tpu.vector_store %arg7[%c0_6, %c0_7], %7 {strides = array<i32>} : memref<32x32xf32, #tpu.memory_space<vmem>>, vector<32x32xf32>,
    %c0_i32_8 = arith.constant 0 : i32
    %9 = arith.cmpi eq, %arg2, %c0_i32_8 : i32
    %10 = arith.extui %9 : i1 to i32
    %c0_i32_9 = arith.constant 0 : i32
    %11 = arith.cmpi ne, %10, %c0_i32_9 : i32
    scf.if %11 {
      %c0_10 = arith.constant 0 : index
      %c0_11 = arith.constant 0 : index
      %12 = vector.load %arg7[%c0_10, %c0_11] : memref<32x32xf32, #tpu.memory_space<vmem>>, vector<32x32xf32>
      %c0_12 = arith.constant 0 : index
      %c0_13 = arith.constant 0 : index
      %13 = vector.load %arg5[%c0_12, %c0_13] : memref<1x32xf32, #tpu.memory_space<vmem>>, vector<1x32xf32>
      %14 = vector.broadcast %13 : vector<1x32xf32> to vector<32x32xf32>
      %15 = arith.addf %12, %14 : vector<32x32xf32>
      %c0_14 = arith.constant 0 : index
      %c0_15 = arith.constant 0 : index
      %16 = vector.load %arg6[%c0_14, %c0_15] : memref<32x32xf32, #tpu.memory_space<vmem>>, vector<32x32xf32>
      tpu.vector_store %arg6[%c0_14, %c0_15], %15 {strides = array<i32>} : memref<32x32xf32, #tpu.memory_space<vmem>>, vector<32x32xf32>,
    } else {
    }
    return
  }
  func.func @transform_0(%arg0: i32, %arg1: i32, %arg2: i32) -> (i32, i32) {
    %c0_i32 = arith.constant 0 : i32
    return %arg0, %arg2 : i32, i32
  }
  func.func @transform_1(%arg0: i32, %arg1: i32, %arg2: i32) -> (i32, i32) {
    %c0_i32 = arith.constant 0 : i32
    return %arg2, %arg1 : i32, i32
  }
  func.func @transform_2(%arg0: i32, %arg1: i32, %arg2: i32) -> (i32, i32) {
    %c0_i32 = arith.constant 0 : i32
    %c0_i32_0 = arith.constant 0 : i32
    return %c0_i32, %arg1 : i32, i32
  }
  func.func @transform_3(%arg0: i32, %arg1: i32, %arg2: i32) -> (i32, i32) {
    %c0_i32 = arith.constant 0 : i32
    return %arg0, %arg1 : i32, i32
  }
}

</mosaic_0001>

<llo_original>
// kernel: tpu_custom_call.1
$region0: #{tpu_custom_call.1}
  #allocation0 [shape = 'u32[]', space=smem, size = 0x4, offset = 0x4, fixed_abs, tag = 'smem constant byte address 0x4 - core index']
  #allocation1 [shape = 'u32[144,128]{1,0:T(1,128)}', space=vmem, size = 0x12000, scoped, tag = 'internal scratch']
  #allocation2 [shape = 'f32[32,32]{1,0:T(8,128)}', space=vmem, size = 0x4000, scoped, tag = 'scratch operand']
  %s0 = inlined_call_operand.vmem [shape: bf16[32,768], index: 0, kind: input, shape index: {}]
  %s1 = inlined_call_operand.vmem [shape: bf16[768,32], index: 1, kind: input, shape index: {}]
  %s2 = inlined_call_operand.vmem [shape: f32[1,32], index: 2, kind: input, shape index: {}]
  %s3 = inlined_call_operand.hbm [shape: f32[32,32], index: 3, kind: output, shape index: {}]
  %s4 = sld [smem:[#allocation0]]
  $region30: #{tpu_custom_call.1} parent=0
    _
  %s6 = ssub.s32 1, %s4
  %s7 = scalar_select 0, %s6, %s4
  $region1: #{tpu_custom_call.1} parent=0
    #allocation3 [shape = 'u8[16384]{0}', space=vmem, size = 0x4000, scoped, tag = 'output window, operand 0, single buffered']
    #allocation4 [shape = 's32[1]{0}', space=sflag, size = 0x4, scoped, tag = 'scoped memory for tpu_custom_call.1']
    %8 = vsyncpa [#allocation4], 0
    // Predicated region
    $region2: #{tpu_custom_call.1} parent=1 // pred_check
      _
    $region3: #{tpu_custom_call.1} parent=1 // pred_check_branch
      %10 = sbr.rel (0) target = $region5
    $region4: #{tpu_custom_call.1} parent=1 // pred_region
      _
    $region5: #{tpu_custom_call.1} parent=1 // pred_fallthru
      _
    // Predicated region
    $region6: #{tpu_custom_call.1} parent=1 // pred_check
      _
    $region7: #{tpu_custom_call.1} parent=1 // pred_check_branch
      %12 = sbr.rel (0) target = $region9
    $region8: #{tpu_custom_call.1} parent=1 // pred_region
      _
    $region9: #{tpu_custom_call.1} parent=1 // pred_fallthru
      _
    // Predicated region
    $region10: #{tpu_custom_call.1} parent=1 // pred_check
      _
    $region11: #{tpu_custom_call.1} parent=1 // pred_check_branch
      %14 = sbr.rel (0) target = $region13
    $region12: #{tpu_custom_call.1} parent=1 // pred_region
      _
    $region13: #{tpu_custom_call.1} parent=1 // pred_fallthru
      _
    %p16 = scmp.eq.s32.totalorder 0, 0
    // Predicated region
    $region14: #{tpu_custom_call.1} parent=1 // pred_check
      %p17 = pneg %p16
    $region15: #{tpu_custom_call.1} parent=1 // pred_check_branch
      %19 = sbr.rel (%p17) target = $region17
    $region16: #{tpu_custom_call.1} parent=1 // pred_region
      %vm20 = vcmask 261120
      %21 = vst.msk [vmem:[#allocation2] sm:$0xff] %vm20, 0.0
      %22 = vst.msk [vmem:[#allocation2 + $0x8] sm:$0xff] %vm20, 0.0
      %23 = vst.msk [vmem:[#allocation2 + $0x10] sm:$0xff] %vm20, 0.0
      %24 = vst.msk [vmem:[#allocation2 + $0x18] sm:$0xff] %vm20, 0.0
    $region17: #{tpu_custom_call.1} parent=1 // pred_fallthru
      _
    %v25 = vld [vmem:[#allocation2] sm:$0xff]
    %v26 = vld [vmem:[#allocation2 + $0x8] sm:$0xff]
    %v27 = vld [vmem:[#allocation2 + $0x10] sm:$0xff]
    %v28 = vld [vmem:[#allocation2 + $0x18] sm:$0xff]
    %v29 = vld [vmem:[%s0] sm:$0xff]
    %v30 = vld [vmem:[%s0 + $0x8] sm:$0xff]
    %v31 = vld [vmem:[%s0 + $0x10] sm:$0xff]
    %v32 = vld [vmem:[%s0 + $0x18] sm:$0xff]
    %v33 = vld [vmem:[%s0 + $0x20] sm:$0xff]
    %v34 = vld [vmem:[%s0 + $0x28] sm:$0xff]
    %v35 = vld [vmem:[%s0 + $0x30] sm:$0xff]
    %v36 = vld [vmem:[%s0 + $0x38] sm:$0xff]
    %v37 = vld [vmem:[%s0 + $0x40] sm:$0xff]
    %v38 = vld [vmem:[%s0 + $0x48] sm:$0xff]
    %v39 = vld [vmem:[%s0 + $0x50] sm:$0xff]
    %v40 = vld [vmem:[%s0 + $0x58] sm:$0xff]
    %v41 = vld [vmem:[%s1] sm:$0xf]
    %v42 = vld [vmem:[%s1 + $0x4] sm:$0xf]
    %v43 = vld [vmem:[%s1 + $0x8] sm:$0xf]
    %v44 = vld [vmem:[%s1 + $0xc] sm:$0xf]
    %v45 = vld [vmem:[%s1 + $0x10] sm:$0xf]
    %v46 = vld [vmem:[%s1 + $0x14] sm:$0xf]
    %v47 = vld [vmem:[%s1 + $0x18] sm:$0xf]
    %v48 = vld [vmem:[%s1 + $0x1c] sm:$0xf]
    %v49 = vld [vmem:[%s1 + $0x20] sm:$0xf]
    %v50 = vld [vmem:[%s1 + $0x24] sm:$0xf]
    %v51 = vld [vmem:[%s1 + $0x28] sm:$0xf]
    %v52 = vld [vmem:[%s1 + $0x2c] sm:$0xf]
    %v53 = vld [vmem:[%s1 + $0x30] sm:$0xf]
    %v54 = vld [vmem:[%s1 + $0x34] sm:$0xf]
    %v55 = vld [vmem:[%s1 + $0x38] sm:$0xf]
    %v56 = vld [vmem:[%s1 + $0x3c] sm:$0xf]
    %v57 = vld [vmem:[%s1 + $0x40] sm:$0xf]
    %v58 = vld [vmem:[%s1 + $0x44] sm:$0xf]
    %v59 = vld [vmem:[%s1 + $0x48] sm:$0xf]
    %v60 = vld [vmem:[%s1 + $0x4c] sm:$0xf]
    %v61 = vld [vmem:[%s1 + $0x50] sm:$0xf]
    %v62 = vld [vmem:[%s1 + $0x54] sm:$0xf]
    %v63 = vld [vmem:[%s1 + $0x58] sm:$0xf]
    %v64 = vld [vmem:[%s1 + $0x5c] sm:$0xf]
    %v65 = vld [vmem:[%s1 + $0x60] sm:$0xf]
    %v66 = vld [vmem:[%s1 + $0x64] sm:$0xf]
    %v67 = vld [vmem:[%s1 + $0x68] sm:$0xf]
    %v68 = vld [vmem:[%s1 + $0x6c] sm:$0xf]
    %v69 = vld [vmem:[%s1 + $0x70] sm:$0xf]
    %v70 = vld [vmem:[%s1 + $0x74] sm:$0xf]
    %v71 = vld [vmem:[%s1 + $0x78] sm:$0xf]
    %v72 = vld [vmem:[%s1 + $0x7c] sm:$0xf]
    %v73 = vld [vmem:[%s1 + $0x80] sm:$0xf]
    %v74 = vld [vmem:[%s1 + $0x84] sm:$0xf]
    %v75 = vld [vmem:[%s1 + $0x88] sm:$0xf]
    %v76 = vld [vmem:[%s1 + $0x8c] sm:$0xf]
    %v77 = vld [vmem:[%s1 + $0x90] sm:$0xf]
    %v78 = vld [vmem:[%s1 + $0x94] sm:$0xf]
    %v79 = vld [vmem:[%s1 + $0x98] sm:$0xf]
    %v80 = vld [vmem:[%s1 + $0x9c] sm:$0xf]
    %v81 = vld [vmem:[%s1 + $0xa0] sm:$0xf]
    %v82 = vld [vmem:[%s1 + $0xa4] sm:$0xf]
    %v83 = vld [vmem:[%s1 + $0xa8] sm:$0xf]
    %v84 = vld [vmem:[%s1 + $0xac] sm:$0xf]
    %v85 = vld [vmem:[%s1 + $0xb0] sm:$0xf]
    %v86 = vld [vmem:[%s1 + $0xb4] sm:$0xf]
    %v87 = vld [vmem:[%s1 + $0xb8] sm:$0xf]
    %v88 = vld [vmem:[%s1 + $0xbc] sm:$0xf]
    %v89 = vld [vmem:[%s1 + $0xc0] sm:$0xf]
    %v90 = vld [vmem:[%s1 + $0xc4] sm:$0xf]
    %v91 = vld [vmem:[%s1 + $0xc8] sm:$0xf]
    %v92 = vld [vmem:[%s1 + $0xcc] sm:$0xf]
    %v93 = vld [vmem:[%s1 + $0xd0] sm:$0xf]
    %v94 = vld [vmem:[%s1 + $0xd4] sm:$0xf]
    %v95 = vld [vmem:[%s1 + $0xd8] sm:$0xf]
    %v96 = vld [vmem:[%s1 + $0xdc] sm:$0xf]
    %v97 = vld [vmem:[%s1 + $0xe0] sm:$0xf]
    %v98 = vld [vmem:[%s1 + $0xe4] sm:$0xf]
    %v99 = vld [vmem:[%s1 + $0xe8] sm:$0xf]
    %v100 = vld [vmem:[%s1 + $0xec] sm:$0xf]
    %v101 = vld [vmem:[%s1 + $0xf0] sm:$0xf]
    %v102 = vld [vmem:[%s1 + $0xf4] sm:$0xf]
    %v103 = vld [vmem:[%s1 + $0xf8] sm:$0xf]
    %v104 = vld [vmem:[%s1 + $0xfc] sm:$0xf]
    %v105 = vld [vmem:[%s1 + $0x100] sm:$0xf]
    %v106 = vld [vmem:[%s1 + $0x104] sm:$0xf]
    %v107 = vld [vmem:[%s1 + $0x108] sm:$0xf]
    %v108 = vld [vmem:[%s1 + $0x10c] sm:$0xf]
    %v109 = vld [vmem:[%s1 + $0x110] sm:$0xf]
    %v110 = vld [vmem:[%s1 + $0x114] sm:$0xf]
    %v111 = vld [vmem:[%s1 + $0x118] sm:$0xf]
    %v112 = vld [vmem:[%s1 + $0x11c] sm:$0xf]
    %v113 = vld [vmem:[%s1 + $0x120] sm:$0xf]
    %v114 = vld [vmem:[%s1 + $0x124] sm:$0xf]
    %v115 = vld [vmem:[%s1 + $0x128] sm:$0xf]
    %v116 = vld [vmem:[%s1 + $0x12c] sm:$0xf]
    %v117 = vld [vmem:[%s1 + $0x130] sm:$0xf]
    %v118 = vld [vmem:[%s1 + $0x134] sm:$0xf]
    %v119 = vld [vmem:[%s1 + $0x138] sm:$0xf]
    %v120 = vld [vmem:[%s1 + $0x13c] sm:$0xf]
    %v121 = vld [vmem:[%s1 + $0x140] sm:$0xf]
    %v122 = vld [vmem:[%s1 + $0x144] sm:$0xf]
    %v123 = vld [vmem:[%s1 + $0x148] sm:$0xf]
    %v124 = vld [vmem:[%s1 + $0x14c] sm:$0xf]
    %v125 = vld [vmem:[%s1 + $0x150] sm:$0xf]
    %v126 = vld [vmem:[%s1 + $0x154] sm:$0xf]
    %v127 = vld [vmem:[%s1 + $0x158] sm:$0xf]
    %v128 = vld [vmem:[%s1 + $0x15c] sm:$0xf]
    %v129 = vld [vmem:[%s1 + $0x160] sm:$0xf]
    %v130 = vld [vmem:[%s1 + $0x164] sm:$0xf]
    %v131 = vld [vmem:[%s1 + $0x168] sm:$0xf]
    %v132 = vld [vmem:[%s1 + $0x16c] sm:$0xf]
    %v133 = vld [vmem:[%s1 + $0x170] sm:$0xf]
    %v134 = vld [vmem:[%s1 + $0x174] sm:$0xf]
    %v135 = vld [vmem:[%s1 + $0x178] sm:$0xf]
    %v136 = vld [vmem:[%s1 + $0x17c] sm:$0xf]
    %v149 = vunpack.c.l.b16 %v29
    %v150 = vunpack.c.h.b16 %v29
    %v151 = vunpack.c.l.b16 %v30
    %v152 = vunpack.c.h.b16 %v30
    %v153 = vunpack.c.l.b16 %v31
    %v154 = vunpack.c.h.b16 %v31
    %v155 = vunpack.c.l.b16 %v32
    %v156 = vunpack.c.h.b16 %v32
    %v157 = vunpack.c.l.b16 %v33
    %v158 = vunpack.c.h.b16 %v33
    %v159 = vunpack.c.l.b16 %v34
    %v160 = vunpack.c.h.b16 %v34
    %v161 = vunpack.c.l.b16 %v35
    %v162 = vunpack.c.h.b16 %v35
    %v163 = vunpack.c.l.b16 %v36
    %v164 = vunpack.c.h.b16 %v36
    %v165 = vunpack.c.l.b16 %v37
    %v166 = vunpack.c.h.b16 %v37
    %v167 = vunpack.c.l.b16 %v38
    %v168 = vunpack.c.h.b16 %v38
    %v169 = vunpack.c.l.b16 %v39
    %v170 = vunpack.c.h.b16 %v39
    %v171 = vunpack.c.l.b16 %v40
    %v172 = vunpack.c.h.b16 %v40
    %v173 = vpack.c.b16 %v155, %v149
    %v174 = vpack.c.b16 %v156, %v150
    %v175 = vpack.c.b16 %v157, %v151
    %v176 = vpack.c.b16 %v158, %v152
    %v177 = vpack.c.b16 %v159, %v153
    %v178 = vpack.c.b16 %v160, %v154
    %v179 = vpack.c.b16 %v167, %v161
    %v180 = vpack.c.b16 %v168, %v162
    %v181 = vpack.c.b16 %v169, %v163
    %v182 = vpack.c.b16 %v170, %v164
    %v183 = vpack.c.b16 %v171, %v165
    %v184 = vpack.c.b16 %v172, %v166
    %v293 = vunpack.c.l.b16 %v41
    %v294 = vunpack.c.l.b16 %v42
    %v295 = vunpack.c.l.b16 %v43
    %v296 = vunpack.c.l.b16 %v44
    %v297 = vunpack.c.l.b16 %v45
    %v298 = vunpack.c.l.b16 %v46
    %v299 = vunpack.c.l.b16 %v47
    %v300 = vunpack.c.l.b16 %v48
    %v301 = vunpack.c.l.b16 %v49
    %v302 = vunpack.c.l.b16 %v50
    %v303 = vunpack.c.l.b16 %v51
    %v304 = vunpack.c.l.b16 %v52
    %v305 = vunpack.c.l.b16 %v53
    %v306 = vunpack.c.l.b16 %v54
    %v307 = vunpack.c.l.b16 %v55
    %v308 = vunpack.c.l.b16 %v56
    %v309 = vunpack.c.l.b16 %v57
    %v310 = vunpack.c.l.b16 %v58
    %v311 = vunpack.c.l.b16 %v59
    %v312 = vunpack.c.l.b16 %v60
    %v313 = vunpack.c.l.b16 %v61
    %v314 = vunpack.c.l.b16 %v62
    %v315 = vunpack.c.l.b16 %v63
    %v316 = vunpack.c.l.b16 %v64
    %v317 = vunpack.c.l.b16 %v65
    %v318 = vunpack.c.l.b16 %v66
    %v319 = vunpack.c.l.b16 %v67
    %v320 = vunpack.c.l.b16 %v68
    %v321 = vunpack.c.l.b16 %v69
    %v322 = vunpack.c.l.b16 %v70
    %v323 = vunpack.c.l.b16 %v71
    %v324 = vunpack.c.l.b16 %v72
    %v325 = vunpack.c.l.b16 %v73
    %v326 = vunpack.c.l.b16 %v74
    %v327 = vunpack.c.l.b16 %v75
    %v328 = vunpack.c.l.b16 %v76
    %v329 = vunpack.c.l.b16 %v77
    %v330 = vunpack.c.l.b16 %v78
    %v331 = vunpack.c.l.b16 %v79
    %v332 = vunpack.c.l.b16 %v80
    %v333 = vunpack.c.l.b16 %v81
    %v334 = vunpack.c.l.b16 %v82
    %v335 = vunpack.c.l.b16 %v83
    %v336 = vunpack.c.l.b16 %v84
    %v337 = vunpack.c.l.b16 %v85
    %v338 = vunpack.c.l.b16 %v86
    %v339 = vunpack.c.l.b16 %v87
    %v340 = vunpack.c.l.b16 %v88
    %v341 = vunpack.c.l.b16 %v89
    %v342 = vunpack.c.l.b16 %v90
    %v343 = vunpack.c.l.b16 %v91
    %v344 = vunpack.c.l.b16 %v92
    %v345 = vunpack.c.l.b16 %v93
    %v346 = vunpack.c.l.b16 %v94
    %v347 = vunpack.c.l.b16 %v95
    %v348 = vunpack.c.l.b16 %v96
    %v349 = vunpack.c.l.b16 %v97
    %v350 = vunpack.c.l.b16 %v98
    %v351 = vunpack.c.l.b16 %v99
    %v352 = vunpack.c.l.b16 %v100
    %v353 = vunpack.c.l.b16 %v101
    %v354 = vunpack.c.l.b16 %v102
    %v355 = vunpack.c.l.b16 %v103
    %v356 = vunpack.c.l.b16 %v104
    %v357 = vunpack.c.l.b16 %v105
    %v358 = vunpack.c.l.b16 %v106
    %v359 = vunpack.c.l.b16 %v107
    %v360 = vunpack.c.l.b16 %v108
    %v361 = vunpack.c.l.b16 %v109
    %v362 = vunpack.c.l.b16 %v110
    %v363 = vunpack.c.l.b16 %v111
    %v364 = vunpack.c.l.b16 %v112
    %v365 = vunpack.c.l.b16 %v113
    %v366 = vunpack.c.l.b16 %v114
    %v367 = vunpack.c.l.b16 %v115
    %v368 = vunpack.c.l.b16 %v116
    %v369 = vunpack.c.l.b16 %v117
    %v370 = vunpack.c.l.b16 %v118
    %v371 = vunpack.c.l.b16 %v119
    %v372 = vunpack.c.l.b16 %v120
    %v373 = vunpack.c.l.b16 %v121
    %v374 = vunpack.c.l.b16 %v122
    %v375 = vunpack.c.l.b16 %v123
    %v376 = vunpack.c.l.b16 %v124
    %v377 = vunpack.c.l.b16 %v125
    %v378 = vunpack.c.l.b16 %v126
    %v379 = vunpack.c.l.b16 %v127
    %v380 = vunpack.c.l.b16 %v128
    %v381 = vunpack.c.l.b16 %v129
    %v382 = vunpack.c.l.b16 %v130
    %v383 = vunpack.c.l.b16 %v131
    %v384 = vunpack.c.l.b16 %v132
    %v385 = vunpack.c.l.b16 %v133
    %v386 = vunpack.c.l.b16 %v134
    %v387 = vunpack.c.l.b16 %v135
    %v388 = vunpack.c.l.b16 %v136
    %v389 = vpack.c.b16 %v294, %v293
    %v390 = vpack.c.b16 %v296, %v295
    %v391 = vpack.c.b16 %v298, %v297
    %v392 = vpack.c.b16 %v300, %v299
    %v393 = vpack.c.b16 %v302, %v301
    %v394 = vpack.c.b16 %v304, %v303
    %v395 = vpack.c.b16 %v306, %v305
    %v396 = vpack.c.b16 %v308, %v307
    %v397 = vpack.c.b16 %v310, %v309
    %v398 = vpack.c.b16 %v312, %v311
    %v399 = vpack.c.b16 %v314, %v313
    %v400 = vpack.c.b16 %v316, %v315
    %v401 = vpack.c.b16 %v318, %v317
    %v402 = vpack.c.b16 %v320, %v319
    %v403 = vpack.c.b16 %v322, %v321
    %v404 = vpack.c.b16 %v324, %v323
    %v405 = vpack.c.b16 %v326, %v325
    %v406 = vpack.c.b16 %v328, %v327
    %v407 = vpack.c.b16 %v330, %v329
    %v408 = vpack.c.b16 %v332, %v331
    %v409 = vpack.c.b16 %v334, %v333
    %v410 = vpack.c.b16 %v336, %v335
    %v411 = vpack.c.b16 %v338, %v337
    %v412 = vpack.c.b16 %v340, %v339
    %v413 = vpack.c.b16 %v342, %v341
    %v414 = vpack.c.b16 %v344, %v343
    %v415 = vpack.c.b16 %v346, %v345
    %v416 = vpack.c.b16 %v348, %v347
    %v417 = vpack.c.b16 %v350, %v349
    %v418 = vpack.c.b16 %v352, %v351
    %v419 = vpack.c.b16 %v354, %v353
    %v420 = vpack.c.b16 %v356, %v355
    %v421 = vpack.c.b16 %v358, %v357
    %v422 = vpack.c.b16 %v360, %v359
    %v423 = vpack.c.b16 %v362, %v361
    %v424 = vpack.c.b16 %v364, %v363
    %v425 = vpack.c.b16 %v366, %v365
    %v426 = vpack.c.b16 %v368, %v367
    %v427 = vpack.c.b16 %v370, %v369
    %v428 = vpack.c.b16 %v372, %v371
    %v429 = vpack.c.b16 %v374, %v373
    %v430 = vpack.c.b16 %v376, %v375
    %v431 = vpack.c.b16 %v378, %v377
    %v432 = vpack.c.b16 %v380, %v379
    %v433 = vpack.c.b16 %v382, %v381
    %v434 = vpack.c.b16 %v384, %v383
    %v435 = vpack.c.b16 %v386, %v385
    %v436 = vpack.c.b16 %v388, %v387
    %485 = vmatprep.subr.bf16.mxu0 0
    %486 = vmatpush1.bf16.msra.mxu0 %v396
    %487 = vmatprep.subr.bf16.mxu0 0
    %488 = vmatpush1.bf16.msra.mxu0 %v395
    %489 = vmatprep.subr.bf16.mxu0 0
    %490 = vmatpush1.bf16.msra.mxu0 %v394
    %491 = vmatprep.subr.bf16.mxu0 0
    %492 = vmatpush1.bf16.msra.mxu0 %v393
    %493 = vmatprep.subr.bf16.mxu0 0
    %494 = vmatpush1.bf16.msra.mxu0 %v392
    %495 = vmatprep.subr.bf16.mxu0 0
    %496 = vmatpush1.bf16.msra.mxu0 %v391
    %497 = vmatprep.subr.bf16.mxu0 0
    %498 = vmatpush1.bf16.msra.mxu0 %v390
    %499 = vmatprep.subr.bf16.mxu0 0
    %500 = vmatpush1.bf16.msra.mxu0 %v389
    %501 = vmatprep.subr.bf16.mxu0 0
    %502 = vmatpush2.bf16.msra.mxu0 %v404
    %503 = vmatprep.subr.bf16.mxu0 0
    %504 = vmatpush2.bf16.msra.mxu0 %v403
    %505 = vmatprep.subr.bf16.mxu0 0
    %506 = vmatpush2.bf16.msra.mxu0 %v402
    %507 = vmatprep.subr.bf16.mxu0 0
    %508 = vmatpush2.bf16.msra.mxu0 %v401
    %509 = vmatprep.subr.bf16.mxu0 0
    %510 = vmatpush2.bf16.msra.mxu0 %v400
    %511 = vmatprep.subr.bf16.mxu0 0
    %512 = vmatpush2.bf16.msra.mxu0 %v399
    %513 = vmatprep.subr.bf16.mxu0 0
    %514 = vmatpush2.bf16.msra.mxu0 %v398
    %515 = vmatprep.subr.bf16.mxu0 0
    %516 = vmatpush2.bf16.msra.mxu0 %v397
    %517 = vmatprep.mubr.bf16.mxu0 %v174
    %518 = vmatmul.mubr.bf16.gmra.mxu0 %v173
    %v519 = vpop.f32.mrf.mxu0
    %v520 = vadd.f32 0.0, %v519
    %v521 = vpop.f32.mrf.mxu0
    %v522 = vpop.f32.mrf.mxu0
    %v523 = vadd.f32 0.0, %v522
    %v524 = vpop.f32.mrf.mxu0
    %525 = vmatprep.mubr.bf16.mxu0 %v180
    %526 = vmatmul.mubr.bf16.gmra.mxu0 %v179
    %v527 = vpop.f32.mrf.mxu0
    %v528 = vadd.f32 0.0, %v527
    %v529 = vpop.f32.mrf.mxu0
    %v530 = vpop.f32.mrf.mxu0
    %v531 = vadd.f32 0.0, %v530
    %v532 = vpop.f32.mrf.mxu0
    %533 = vdwg.mxu0
    %534 = vmatprep.subr.bf16.mxu0 0
    %535 = vmatpush1.bf16.msra.mxu0 %v412
    %536 = vmatprep.subr.bf16.mxu0 0
    %537 = vmatpush1.bf16.msra.mxu0 %v411
    %538 = vmatprep.subr.bf16.mxu0 0
    %539 = vmatpush1.bf16.msra.mxu0 %v410
    %540 = vmatprep.subr.bf16.mxu0 0
    %541 = vmatpush1.bf16.msra.mxu0 %v409
    %542 = vmatprep.subr.bf16.mxu0 0
    %543 = vmatpush1.bf16.msra.mxu0 %v408
    %544 = vmatprep.subr.bf16.mxu0 0
    %545 = vmatpush1.bf16.msra.mxu0 %v407
    %546 = vmatprep.subr.bf16.mxu0 0
    %547 = vmatpush1.bf16.msra.mxu0 %v406
    %548 = vmatprep.subr.bf16.mxu0 0
    %549 = vmatpush1.bf16.msra.mxu0 %v405
    %550 = vmatprep.subr.bf16.mxu0 0
    %551 = vmatpush2.bf16.msra.mxu0 %v420
    %552 = vmatprep.subr.bf16.mxu0 0
    %553 = vmatpush2.bf16.msra.mxu0 %v419
    %554 = vmatprep.subr.bf16.mxu0 0
    %555 = vmatpush2.bf16.msra.mxu0 %v418
    %556 = vmatprep.subr.bf16.mxu0 0
    %557 = vmatpush2.bf16.msra.mxu0 %v417
    %558 = vmatprep.subr.bf16.mxu0 0
    %559 = vmatpush2.bf16.msra.mxu0 %v416
    %560 = vmatprep.subr.bf16.mxu0 0
    %561 = vmatpush2.bf16.msra.mxu0 %v415
    %562 = vmatprep.subr.bf16.mxu0 0
    %563 = vmatpush2.bf16.msra.mxu0 %v414
    %564 = vmatprep.subr.bf16.mxu0 0
    %565 = vmatpush2.bf16.msra.mxu0 %v413
    %566 = vmatprep.mubr.bf16.mxu0 %v176
    %567 = vmatmul.mubr.bf16.gmra.mxu0 %v175
    %v568 = vpop.f32.mrf.mxu0
    %v569 = vadd.f32 %v520, %v568
    %v570 = vpop.f32.mrf.mxu0
    %v571 = vpop.f32.mrf.mxu0
    %v572 = vadd.f32 %v523, %v571
    %v573 = vpop.f32.mrf.mxu0
    %574 = vmatprep.mubr.bf16.mxu0 %v182
    %575 = vmatmul.mubr.bf16.gmra.mxu0 %v181
    %v576 = vpop.f32.mrf.mxu0
    %v577 = vadd.f32 %v528, %v576
    %v578 = vpop.f32.mrf.mxu0
    %v579 = vpop.f32.mrf.mxu0
    %v580 = vadd.f32 %v531, %v579
    %v581 = vpop.f32.mrf.mxu0
    %582 = vdwg.mxu0
    %583 = vmatprep.subr.bf16.mxu0 0
    %584 = vmatpush1.bf16.msra.mxu0 %v428
    %585 = vmatprep.subr.bf16.mxu0 0
    %586 = vmatpush1.bf16.msra.mxu0 %v427
    %587 = vmatprep.subr.bf16.mxu0 0
    %588 = vmatpush1.bf16.msra.mxu0 %v426
    %589 = vmatprep.subr.bf16.mxu0 0
    %590 = vmatpush1.bf16.msra.mxu0 %v425
    %591 = vmatprep.subr.bf16.mxu0 0
    %592 = vmatpush1.bf16.msra.mxu0 %v424
    %593 = vmatprep.subr.bf16.mxu0 0
    %594 = vmatpush1.bf16.msra.mxu0 %v423
    %595 = vmatprep.subr.bf16.mxu0 0
    %596 = vmatpush1.bf16.msra.mxu0 %v422
    %597 = vmatprep.subr.bf16.mxu0 0
    %598 = vmatpush1.bf16.msra.mxu0 %v421
    %599 = vmatprep.subr.bf16.mxu0 0
    %600 = vmatpush2.bf16.msra.mxu0 %v436
    %601 = vmatprep.subr.bf16.mxu0 0
    %602 = vmatpush2.bf16.msra.mxu0 %v435
    %603 = vmatprep.subr.bf16.mxu0 0
    %604 = vmatpush2.bf16.msra.mxu0 %v434
    %605 = vmatprep.subr.bf16.mxu0 0
    %606 = vmatpush2.bf16.msra.mxu0 %v433
    %607 = vmatprep.subr.bf16.mxu0 0
    %608 = vmatpush2.bf16.msra.mxu0 %v432
    %609 = vmatprep.subr.bf16.mxu0 0
    %610 = vmatpush2.bf16.msra.mxu0 %v431
    %611 = vmatprep.subr.bf16.mxu0 0
    %612 = vmatpush2.bf16.msra.mxu0 %v430
    %613 = vmatprep.subr.bf16.mxu0 0
    %614 = vmatpush2.bf16.msra.mxu0 %v429
    %615 = vmatprep.mubr.bf16.mxu0 %v178
    %616 = vmatmul.mubr.bf16.gmra.mxu0 %v177
    %v617 = vpop.f32.mrf.mxu0
    %v618 = vadd.f32 %v569, %v617
    %v619 = vpop.f32.mrf.mxu0
    %v620 = vpop.f32.mrf.mxu0
    %v621 = vadd.f32 %v572, %v620
    %v622 = vpop.f32.mrf.mxu0
    %623 = vmatprep.mubr.bf16.mxu0 %v184
    %624 = vmatmul.mubr.bf16.gmra.mxu0 %v183
    %v625 = vpop.f32.mrf.mxu0
    %v626 = vadd.f32 %v577, %v625
    %v627 = vpop.f32.mrf.mxu0
    %v628 = vpop.f32.mrf.mxu0
    %v629 = vadd.f32 %v580, %v628
    %v630 = vpop.f32.mrf.mxu0
    %631 = vdwg.mxu0
    %v632 = vadd.f32 %v25, %v618
    %v633 = vadd.f32 %v26, %v621
    %v634 = vadd.f32 %v27, %v626
    %v635 = vadd.f32 %v28, %v629
    %vm636 = vcmask 261120
    %637 = vst.msk [vmem:[#allocation2] sm:$0xff] %vm636, %v632
    %638 = vst.msk [vmem:[#allocation2 + $0x8] sm:$0xff] %vm636, %v633
    %639 = vst.msk [vmem:[#allocation2 + $0x10] sm:$0xff] %vm636, %v634
    %640 = vst.msk [vmem:[#allocation2 + $0x18] sm:$0xff] %vm636, %v635
    // Predicated region
    $region18: #{tpu_custom_call.1} parent=1 // pred_check
      %p641 = pneg %p16
    $region19: #{tpu_custom_call.1} parent=1 // pred_check_branch
      %643 = sbr.rel (%p641) target = $region21
    $region20: #{tpu_custom_call.1} parent=1 // pred_region
      %v644 = vld [vmem:[#allocation2] sm:$0xff]
      %v645 = vld [vmem:[#allocation2 + $0x8] sm:$0xff]
      %v646 = vld [vmem:[#allocation2 + $0x10] sm:$0xff]
      %v647 = vld [vmem:[#allocation2 + $0x18] sm:$0xff]
      %v648 = vld [vmem:[%s2] sm:$0x1]
      %v650 = vlaneseq
      %v651 = vshrl.u32 %v650, 7
      %v652 = vsub.s32 0, %v651
      %v653 = vrot.slane %v648, %v652
      %v655 = vadd.f32 %v644, %v653
      %v656 = vadd.f32 %v645, %v653
      %v657 = vadd.f32 %v646, %v653
      %v658 = vadd.f32 %v647, %v653
      %659 = vst.msk [vmem:[#allocation3] sm:$0xff] %vm636, %v655
      %660 = vst.msk [vmem:[#allocation3 + $0x8] sm:$0xff] %vm636, %v656
      %661 = vst.msk [vmem:[#allocation3 + $0x10] sm:$0xff] %vm636, %v657
      %662 = vst.msk [vmem:[#allocation3 + $0x18] sm:$0xff] %vm636, %v658
    $region21: #{tpu_custom_call.1} parent=1 // pred_fallthru
      _
    // Predicated region
    $region22: #{tpu_custom_call.1} parent=1 // pred_check
      _
    $region23: #{tpu_custom_call.1} parent=1 // pred_check_branch
      %664 = sbr.rel (0) target = $region25
    $region24: #{tpu_custom_call.1} parent=1 // pred_region
      %s666 = ssub.s32 512, 512
      %667 = vsyncadd [#allocation4], %s666
      %s668 = sshll.u32 [#allocation3], 4
      %s669 = int_to_ptr.vmem [resolvable:$true] %s668
      %674 = dma.vmem_to_hbm [thread:$0]  %s669, 512, %s3, [#allocation4], 128, 128, 8
    $region25: #{tpu_custom_call.1} parent=1 // pred_fallthru
      _
    // Predicated region
    $region26: #{tpu_custom_call.1} parent=1 // pred_check
      _
    $region27: #{tpu_custom_call.1} parent=1 // pred_check_branch
      %676 = sbr.rel (0) target = $region29
    $region28: #{tpu_custom_call.1} parent=1 // pred_region
      %677 = dma.done [#allocation4], 512
    $region29: #{tpu_custom_call.1} parent=1 // pred_fallthru
      _
    %678 = vsyncpa [#allocation4], 1

</llo_original>
